<compile_context>
chip_gen: v7x
topology: tpu7x:2x2x1
jax: 0.10.0
libtpu: 0.0.40
codegen_flags: <defaults>
</compile_context>

<pallas_src>
import functools
import math

import numpy as np
import jax
import jax.numpy as jnp
from jax.experimental import pallas as pl
from jax.experimental.pallas import tpu as pltpu

MIN_REAL = float(jnp.finfo(jnp.float32).min)   # torch.finfo(dtype).min equivalent


# ----------------------------------------------------------------------------
# Pallas kernel: noisy gs() hot path (channel mix + clamped entropy reduction)
# ----------------------------------------------------------------------------
def _gs_noise_kernel(a, b, probs_ref, seg_ref, msg_ref, ent_ref):
    """probs_ref / msg_ref: (TM, W) VMEM tiles, W = pack*v_pad (multiple of 128).
    seg_ref: (W, pack) bf16 segment matrix, -1.0 on valid (non-padded) vocab
    lanes of each group, 0 elsewhere; resident (constant block index).
    ent_ref: (TM, pack).  a, b are compile-time channel-mix constants.

    NOTE: when TM does not divide the row count, the padded rows of the last
    block run log2 on uninitialized VMEM (possible NaNs).  Harmless because
    rows are fully independent and the writeback of those rows is masked —
    do NOT add any cross-row reduction to this kernel."""
    x = probs_ref[...]                                   # (TM, W) f32

    # Symmetric channel mix  q = (1-p)*x + p*(1-x)/(V-1)  ==  a*x + b.
    mixed = x * a + b
    msg_ref[...] = mixed                                 # lane-dense unmasked store

    # Shannon entropy terms (base 2), torch clamp convention (clamp log2 at finfo.min).
    log2_mixed = jnp.maximum(jnp.log2(mixed), MIN_REAL)  # EUP + VPU
    contrib = mixed * log2_mixed                         # negation folded into seg

    # Segmented lane reduction on the MXU: sums each group's first V lanes only
    # (padded lanes have seg == 0).  Single default-precision bf16 MXU pass;
    # ~2^-8 relative error on the entropy, well inside the reference tolerance.
    ent_ref[...] = jnp.dot(contrib.astype(jnp.bfloat16), seg_ref[...],
                           preferred_element_type=jnp.float32)


# ----------------------------------------------------------------------------
# Layout / budget helpers
# ----------------------------------------------------------------------------
def _choose_packing(vocab, n_rows):
    """Pick (v_pad, pack): v_pad >= vocab with pack*v_pad a multiple of 128
    (lane-dense layout) and pack*v_pad <= 1024.  Guardrail: MXU MACs scale with
    pack while the ent tensor is a negligible fraction of HBM traffic, so pack
    is NOT enlarged just to make the ent output lane-dense.  Prefers a pack
    that divides n_rows so the reshape is free (no row padding)."""
    if vocab > 128:
        return ((vocab + 127) // 128) * 128, 1
    v_pad = next(c for c in (1, 2, 4, 8, 16, 32, 64, 128) if c >= vocab)
    packs = [t // v_pad for t in (1024, 512, 256, 128) if t >= v_pad]
    for pack in packs:
        if n_rows % pack == 0:
            return v_pad, pack          # free reshape, no row padding
    return v_pad, packs[-1]             # smallest (>=128-lane) pack -> least row padding


def _vmem_budget():
    """(pipeline+temps budget, vmem_limit_bytes), gated per TPU generation:
    v5e/v6e have 128 MiB physical VMEM (big tiles amortize per-step overhead),
    v7x only 64 MiB so keep the conservative cap there."""
    try:
        cap = getattr(pltpu.get_tpu_info(), "vmem_capacity_bytes", None)
    except Exception:
        cap = None
    if cap is not None and cap >= 96 * 1024 * 1024:       # v5e / v6e
        return 48 * 1024 * 1024, 64 * 1024 * 1024
    return 22 * 1024 * 1024, 32 * 1024 * 1024             # v7x / unknown: stay safe


# ----------------------------------------------------------------------------
# Noisy gs() wrapper (pallas_call + packing + custom VJP)
# ----------------------------------------------------------------------------
def _gs_noisy_impl(probs, a, b, vocab):
    B, L, V = probs.shape
    n = B * L
    v_pad, pack = _choose_packing(V, n)
    w = pack * v_pad
    n_rows = ((n + pack - 1) // pack) * pack
    n_packed = n_rows // pack

    x = probs.reshape(n, V)
    if v_pad != V:                       # pad vocab lanes so W is a multiple of 128
        x = jnp.pad(x, ((0, 0), (0, v_pad - V)))
    if n_rows != n:                      # pad symbol rows to a multiple of pack
        x = jnp.pad(x, ((0, n_rows - n), (0, 0)))
    x = x.reshape(n_packed, w)           # lane-dense (free view when no padding)

    # Segment matrix, built once on the host and passed as a resident input
    # (constant block index => DMA'd once): -1.0 where the lane belongs to group
    # g AND indexes a real (< V) vocab entry, 0 on zero-padded lanes.
    lane = np.arange(w)
    seg_np = np.where(
        (lane[:, None] // v_pad == np.arange(pack)[None, :])
        & ((lane % v_pad) < V)[:, None],
        -1.0, 0.0)
    seg = jnp.asarray(seg_np, dtype=jnp.bfloat16)        # 0 / -1 exact in bf16

    # Row-tile size.  Budget counts the double-buffered in/out tiles AND the
    # matmul operand temporaries (contrib f32 + its bf16 cast) plus seg.
    budget, vmem_limit = _vmem_budget()
    budget -= 2 * 2 * w * pack                           # resident seg (bf16, 2 bufs)
    bytes_per_row = (2 * 4 * w) + (2 * 4 * w) + (2 * 4 * pack) + (4 * w) + (2 * w)
    tm = max(8, min(2048, budget // bytes_per_row))
    tm = (tm // 8) * 8
    if n_packed >= 16:
        # Guarantee >= 2 grid programs so dimension_semantics=("parallel",)
        # can shard the grid across v7x's two TensorCores (no-op on v5e/v6e).
        half = ((((n_packed + 1) // 2) + 7) // 8) * 8
        tm = min(tm, half)
    else:
        tm = n_packed                                    # full-extent block is always legal
    grid = (pl.cdiv(n_packed, tm),)

    kernel = functools.partial(_gs_noise_kernel, a, b)
    msg_p, ent_p = pl.pallas_call(
        kernel,
        out_shape=(
            jax.ShapeDtypeStruct((n_packed, w), probs.dtype),
            jax.ShapeDtypeStruct((n_packed, pack), probs.dtype),
        ),
        grid=grid,
        in_specs=[
            pl.BlockSpec((tm, w), lambda i: (i, 0)),
            pl.BlockSpec((w, pack), lambda i: (0, 0)),   # resident constant block
        ],
        out_specs=(
            pl.BlockSpec((tm, w), lambda i: (i, 0)),
            pl.BlockSpec((tm, pack), lambda i: (i, 0)),
        ),
        compiler_params=pltpu.CompilerParams(
            dimension_semantics=("parallel",),           # megacore split on v7x
            vmem_limit_bytes=vmem_limit,
        ),
    )(x, seg)

    msg = msg_p.reshape(n_rows, v_pad)[:n, :V].reshape(B, L, V)
    ent = ent_p.reshape(n_rows)[:n].reshape(B, L)
    return msg, ent


@functools.partial(jax.custom_vjp, nondiff_argnums=(1, 2, 3))
def _gs_noisy(probs, a, b, vocab):
    return _gs_noisy_impl(probs, a, b, vocab)


def _gs_noisy_fwd(probs, a, b, vocab):
    return _gs_noisy_impl(probs, a, b, vocab), None


def _gs_noisy_bwd(a, b, vocab, _res, cts):
    dmsg, _dent = cts
    # msg = a*probs + b (elementwise); entropy outputs are detach()'d in forward().
    return (a * dmsg,)


_gs_noisy.defvjp(_gs_noisy_fwd, _gs_noisy_bwd)


def channel_gs(probs, entropies, error_prob, apply_noise):
    """gs() hot path.  apply_noise=False is a pure identity in this channel:
    no kernel launch, no extra HBM round trip."""
    if not apply_noise:
        return probs, entropies
    V = probs.shape[-1]
    assert probs.ndim == 3 and V > 1, "need (B, L, V) probs with vocab_size > 1"
    # TODO(synk): error_prob is assumed concrete (host value); if it must be
    #             traced, pass a/b through SMEM scalar prefetch instead.
    p = float(error_prob)
    a = (1.0 - p) - p / float(V - 1)
    b = p / float(V - 1)
    return _gs_noisy(probs, a, b, V)


# ----------------------------------------------------------------------------
# Channel.__init__-time glue (plain Python, deterministic)
# ----------------------------------------------------------------------------
def make_channel_constants(error_prob, max_len, vocab_size):
    # Concrete _max_symbol_entropy: uniform upper bound log2(vocab).
    def max_symbol_entropy(v):
        return math.log2(v) if v > 1 else 0.0

    max_sym_ent = max_symbol_entropy(vocab_size)
    max_msg_ent = {i: max_symbol_entropy(vocab_size - 1) * i for i in range(max_len + 1)}
    return {
        "p": jnp.float32(error_prob),
        "max_symbol_entropy": jnp.float32(max_sym_ent),
        "max_message_entropy": max_msg_ent,
    }


# ----------------------------------------------------------------------------
# Channel.forward (messages.dim() == 3 branch)
# ----------------------------------------------------------------------------
def channel_forward(messages, symbol_entropies, error_prob):
    """messages: (B, L, V) GS probabilities; symbol_entropies: (B, L)."""
    assert messages.ndim == 3, "only the 3-D (GS) branch is implemented"

    # Noisy pass: single fused Pallas kernel (one HBM read of messages).
    msg, entropies = channel_gs(messages, symbol_entropies, error_prob, apply_noise=True)
    # No-noise pass: pure identity -> no second kernel launch, no extra HBM traffic.
    msg_nn, entropies_nn = channel_gs(messages, symbol_entropies, error_prob, apply_noise=False)

    B, L, _ = messages.shape
    output_dict = {
        "entropy_msg":     jnp.zeros((B,), dtype=messages.dtype),
        "entropy_msg_nn":  jnp.zeros((B,), dtype=messages.dtype),
        "entropy_smb":     jax.lax.stop_gradient(entropies),     # (B, L)
        "entropy_smb_nn":  jax.lax.stop_gradient(entropies_nn),  # (B, L)
        "length_probs":    jnp.zeros((B, L + 1), dtype=messages.dtype),
        "length_probs_nn": jnp.zeros((B, L + 1), dtype=messages.dtype),
    }
    return msg, msg_nn, output_dict


if __name__ == "__main__":
    # Case 1: vocab divides 128 (free packed reshape). batch=2, max_len=8, vocab=16.
    B, L, V = 2, 8, 16
    error_prob = 0.1
    _ = make_channel_constants(error_prob, max_len=L, vocab_size=V)

    key = jax.random.PRNGKey(0)
    k1, k2 = jax.random.split(key)
    logits = jax.random.normal(k1, (B, L, V), dtype=jnp.float32)
    messages = jax.nn.softmax(logits, axis=-1)                     # GS-style probs
    log2_m = jnp.maximum(jnp.log2(messages), MIN_REAL)
    symbol_entropies = -jnp.sum(messages * log2_m, axis=-1)        # (B, L)

    msg, msg_nn, out = channel_forward(messages, symbol_entropies, error_prob)
    jax.block_until_ready((msg, msg_nn, out))

    # Pure-JAX reference for the noisy path.
    p = error_prob
    mixed_ref = (1.0 - p) * messages + p * (1.0 - messages) / (V - 1)
    ent_ref = -jnp.sum(mixed_ref * jnp.maximum(jnp.log2(mixed_ref), MIN_REAL), axis=-1)

    assert msg.shape == (B, L, V) and msg_nn.shape == (B, L, V)
    assert out["entropy_smb"].shape == (B, L)
    assert out["length_probs"].shape == (B, L + 1)
    assert bool(jnp.allclose(msg, mixed_ref, atol=1e-5, rtol=1e-5))
    assert bool(jnp.allclose(msg_nn, messages))
    assert bool(jnp.allclose(out["entropy_smb"], ent_ref, atol=1e-2, rtol=1e-2))
    assert bool(jnp.allclose(out["entropy_smb_nn"], symbol_entropies))

    # Gradient through the noisy message (custom VJP: dprobs = a * dmsg).
    a_const = (1.0 - p) - p / float(V - 1)
    g = jax.grad(
        lambda m: jnp.sum(channel_gs(m, symbol_entropies, error_prob, True)[0])
    )(messages)
    assert bool(jnp.allclose(g, jnp.full_like(messages, a_const), atol=1e-6))

    # Case 2: vocab that does NOT divide 128 (exercises the zero-padded lane path).
    B2, L2, V2 = 2, 6, 50
    logits2 = jax.random.normal(k2, (B2, L2, V2), dtype=jnp.float32)
    messages2 = jax.nn.softmax(logits2, axis=-1)
    ent_in2 = -jnp.sum(messages2 * jnp.maximum(jnp.log2(messages2), MIN_REAL), axis=-1)
    msg2, ent2 = channel_gs(messages2, ent_in2, error_prob, True)
    jax.block_until_ready((msg2, ent2))
    mixed_ref2 = (1.0 - p) * messages2 + p * (1.0 - messages2) / (V2 - 1)
    ent_ref2 = -jnp.sum(mixed_ref2 * jnp.maximum(jnp.log2(mixed_ref2), MIN_REAL), axis=-1)
    assert bool(jnp.allclose(msg2, mixed_ref2, atol=1e-5, rtol=1e-5))
    assert bool(jnp.allclose(ent2, ent_ref2, atol=1e-2, rtol=1e-2))

    print("KERNEL_OK")
</pallas_src>

<mosaic_0001>
module attributes {stable_mosaic.version = 11 : i64} {
  func.func @_gs_noise_kernel(%arg0: i32, %arg1: memref<1x256xf32, #tpu.memory_space<vmem>>, %arg2: memref<256x16xbf16, #tpu.memory_space<vmem>>, %arg3: memref<1x256xf32, #tpu.memory_space<vmem>>, %arg4: memref<1x16xf32, #tpu.memory_space<vmem>>) attributes {dimension_semantics = [#tpu.dimension_semantics<parallel>], iteration_bounds = array<i64: 1>, scalar_prefetch = 0 : i64, scratch_operands = 0 : i64, tpu.core_type = #tpu.core_type<tc>, window_params = [{transform_indices = @transform_0, window_bounds = array<i64: 1, 256>}, {pipeline_mode = #tpu.pipeline_mode<synchronous>, transform_indices = @transform_1, window_bounds = array<i64: 256, 16>}, {transform_indices = @transform_2, window_bounds = array<i64: 1, 256>}, {transform_indices = @transform_3, window_bounds = array<i64: 1, 16>}]} {
    %c0 = arith.constant 0 : index
    %c0_0 = arith.constant 0 : index
    %0 = vector.load %arg1[%c0, %c0_0] : memref<1x256xf32, #tpu.memory_space<vmem>>, vector<1x256xf32>
    %cst = arith.constant 0.893333315 : f32
    %1 = vector.broadcast %cst : f32 to vector<1x256xf32>
    %2 = arith.mulf %0, %1 : vector<1x256xf32>
    %cst_1 = arith.constant 0.00666666683 : f32
    %3 = vector.broadcast %cst_1 : f32 to vector<1x256xf32>
    %4 = arith.addf %2, %3 : vector<1x256xf32>
    %c0_2 = arith.constant 0 : index
    %c0_3 = arith.constant 0 : index
    %5 = vector.load %arg3[%c0_2, %c0_3] : memref<1x256xf32, #tpu.memory_space<vmem>>, vector<1x256xf32>
    tpu.vector_store %arg3[%c0_2, %c0_3], %4 {strides = array<i32>} : memref<1x256xf32, #tpu.memory_space<vmem>>, vector<1x256xf32>,
    %6 = math.log %4 : vector<1x256xf32>
    %cst_4 = arith.constant 2.000000e+00 : f32
    %7 = math.log %cst_4 : f32
    %8 = vector.broadcast %7 : f32 to vector<1x256xf32>
    %9 = arith.divf %6, %8 : vector<1x256xf32>
    %cst_5 = arith.constant -3.40282347E+38 : f32
    %10 = vector.broadcast %cst_5 : f32 to vector<1x256xf32>
    %11 = arith.maximumf %9, %10 : vector<1x256xf32>
    %12 = arith.mulf %4, %11 : vector<1x256xf32>
    %13 = arith.truncf %12 : vector<1x256xf32> to vector<1x256xbf16>
    %c0_6 = arith.constant 0 : index
    %c0_7 = arith.constant 0 : index
    %14 = vector.load %arg2[%c0_6, %c0_7] : memref<256x16xbf16, #tpu.memory_space<vmem>>, vector<256x16xbf16>
    %cst_8 = arith.constant dense<0.000000e+00> : vector<1x16xf32>
    %15 = tpu.matmul %13, %14, %cst_8 {dimension_numbers = #tpu.dot_dimension_numbers<[1], [0], [0], [1], [0, 0, 1, 1], [], []>} : vector<1x256xbf16>, vector<256x16xbf16>, vector<1x16xf32> -> vector<1x16xf32>
    %c0_9 = arith.constant 0 : index
    %c0_10 = arith.constant 0 : index
    %16 = vector.load %arg4[%c0_9, %c0_10] : memref<1x16xf32, #tpu.memory_space<vmem>>, vector<1x16xf32>
    tpu.vector_store %arg4[%c0_9, %c0_10], %15 {strides = array<i32>} : memref<1x16xf32, #tpu.memory_space<vmem>>, vector<1x16xf32>,
    return
  }
  func.func @transform_0(%arg0: i32) -> (i32, i32) {
    %c0_i32 = arith.constant 0 : i32
    %c0_i32_0 = arith.constant 0 : i32
    return %arg0, %c0_i32 : i32, i32
  }
  func.func @transform_1(%arg0: i32) -> (i32, i32) {
    %c0_i32 = arith.constant 0 : i32
    %c0_i32_0 = arith.constant 0 : i32
    %c0_i32_1 = arith.constant 0 : i32
    return %c0_i32, %c0_i32_0 : i32, i32
  }
  func.func @transform_2(%arg0: i32) -> (i32, i32) {
    %c0_i32 = arith.constant 0 : i32
    %c0_i32_0 = arith.constant 0 : i32
    return %arg0, %c0_i32 : i32, i32
  }
  func.func @transform_3(%arg0: i32) -> (i32, i32) {
    %c0_i32 = arith.constant 0 : i32
    %c0_i32_0 = arith.constant 0 : i32
    return %arg0, %c0_i32 : i32, i32
  }
}

</mosaic_0001>

<llo_original>
// kernel: tpu_custom_call.1
$region0: #{tpu_custom_call.1}
  #allocation0 [shape = 'u32[]', space=smem, size = 0x4, offset = 0x4, fixed_abs, tag = 'smem constant byte address 0x4 - core index']
  #allocation1 [shape = 'u32[144,128]{1,0:T(1,128)}', space=vmem, size = 0x12000, scoped, tag = 'internal scratch']
  %s0 = inlined_call_operand.vmem [shape: f32[1,256], index: 0, kind: input, shape index: {}]
  %s1 = inlined_call_operand.vmem [shape: bf16[256,16], index: 1, kind: input, shape index: {}]
  %s2 = inlined_call_operand.hbm [shape: f32[1,256], index: 2, kind: output, shape index: {0}]
  %s3 = inlined_call_operand.hbm [shape: f32[1,16], index: 3, kind: output, shape index: {1}]
  %4 = xla_tuple %s2, %s3
  %s5 = sld [smem:[#allocation0]]
  $region26: #{tpu_custom_call.1} parent=0
    _
  %s7 = ssub.s32 1, %s5
  %s8 = scalar_select 0, %s7, %s5
  $region1: #{tpu_custom_call.1} parent=0
    #allocation2 [shape = 'u8[1024]{0}', space=vmem, size = 0x400, scoped, tag = 'output window, operand 0, single buffered']
    #allocation3 [shape = 's32[1]{0}', space=sflag, size = 0x4, scoped, tag = 'scoped memory for tpu_custom_call.1']
    #allocation4 [shape = 'u8[512]{0}', space=vmem, size = 0x400, scoped, tag = 'output window, operand 1, single buffered']
    #allocation5 [shape = 's32[1]{0}', space=sflag, size = 0x4, scoped, tag = 'scoped memory for tpu_custom_call.1']
    %9 = vsyncpa [#allocation3], 0
    %10 = vsyncpa [#allocation5], 0
    // Predicated region
    $region2: #{tpu_custom_call.1} parent=1 // pred_check
      _
    $region3: #{tpu_custom_call.1} parent=1 // pred_check_branch
      %12 = sbr.rel (0) target = $region5
    $region4: #{tpu_custom_call.1} parent=1 // pred_region
      _
    $region5: #{tpu_custom_call.1} parent=1 // pred_fallthru
      _
    // Predicated region
    $region6: #{tpu_custom_call.1} parent=1 // pred_check
      _
    $region7: #{tpu_custom_call.1} parent=1 // pred_check_branch
      %14 = sbr.rel (0) target = $region9
    $region8: #{tpu_custom_call.1} parent=1 // pred_region
      _
    $region9: #{tpu_custom_call.1} parent=1 // pred_fallthru
      _
    %v16 = vld [vmem:[%s0] sm:$0x3]
    %v17 = vmul.f32 %v16, 0.8933333
    %v18 = vadd.f32 %v17, 0.006666667
    %v19 = vlaneseq
    %vm20 = vcmp.ge.s32.totalorder %v19, 0
    %vm21 = vcmp.lt.s32.totalorder %v19, 256
    %vm22 = vmand %vm20, %vm21
    %23 = vst.msk [vmem:[#allocation2] sm:$0x3] %vm22, %v18
    %v24 = vlog2.pop %v18
    %v25 = vmul.f32 %v24, 0.6931472
    %v26 = vrcp.pop 0.6931472
    %v27 = vmul.f32 %v25, %v26
    %v28 = vmax.f32 %v27, -3.4028235e+38
    %v29 = vmul.f32 %v18, %v28
    %v31 = vlaneseq
    %v32 = vshrl.u32 %v31, 7
    %v33 = vsub.s32 0, %v32
    %v34 = vrot.slane %v29, %v33
    %v35 = vlaneseq
    %v36 = vshrl.u32 %v35, 7
    %v37 = vsub.s32 1, %v36
    %v38 = vrot.slane %v29, %v37
    %v41 = vpack.c.bf16 %v34, %v34
    %v42 = vpack.c.bf16 %v38, %v38
    %v43 = vld [vmem:[%s1] sm:$0xf]
    %v44 = vld [vmem:[%s1 + $0x4] sm:$0xf]
    %v45 = vld [vmem:[%s1 + $0x8] sm:$0xf]
    %v46 = vld [vmem:[%s1 + $0xc] sm:$0xf]
    %v47 = vld [vmem:[%s1 + $0x10] sm:$0xf]
    %v48 = vld [vmem:[%s1 + $0x14] sm:$0xf]
    %v49 = vld [vmem:[%s1 + $0x18] sm:$0xf]
    %v50 = vld [vmem:[%s1 + $0x1c] sm:$0xf]
    %v51 = vld [vmem:[%s1 + $0x20] sm:$0xf]
    %v52 = vld [vmem:[%s1 + $0x24] sm:$0xf]
    %v53 = vld [vmem:[%s1 + $0x28] sm:$0xf]
    %v54 = vld [vmem:[%s1 + $0x2c] sm:$0xf]
    %v55 = vld [vmem:[%s1 + $0x30] sm:$0xf]
    %v56 = vld [vmem:[%s1 + $0x34] sm:$0xf]
    %v57 = vld [vmem:[%s1 + $0x38] sm:$0xf]
    %v58 = vld [vmem:[%s1 + $0x3c] sm:$0xf]
    %v59 = vld [vmem:[%s1 + $0x40] sm:$0xf]
    %v60 = vld [vmem:[%s1 + $0x44] sm:$0xf]
    %v61 = vld [vmem:[%s1 + $0x48] sm:$0xf]
    %v62 = vld [vmem:[%s1 + $0x4c] sm:$0xf]
    %v63 = vld [vmem:[%s1 + $0x50] sm:$0xf]
    %v64 = vld [vmem:[%s1 + $0x54] sm:$0xf]
    %v65 = vld [vmem:[%s1 + $0x58] sm:$0xf]
    %v66 = vld [vmem:[%s1 + $0x5c] sm:$0xf]
    %v67 = vld [vmem:[%s1 + $0x60] sm:$0xf]
    %v68 = vld [vmem:[%s1 + $0x64] sm:$0xf]
    %v69 = vld [vmem:[%s1 + $0x68] sm:$0xf]
    %v70 = vld [vmem:[%s1 + $0x6c] sm:$0xf]
    %v71 = vld [vmem:[%s1 + $0x70] sm:$0xf]
    %v72 = vld [vmem:[%s1 + $0x74] sm:$0xf]
    %v73 = vld [vmem:[%s1 + $0x78] sm:$0xf]
    %v74 = vld [vmem:[%s1 + $0x7c] sm:$0xf]
    %v107 = vunpack.c.l.b16 %v43
    %v108 = vunpack.c.l.b16 %v44
    %v109 = vunpack.c.l.b16 %v45
    %v110 = vunpack.c.l.b16 %v46
    %v111 = vunpack.c.l.b16 %v47
    %v112 = vunpack.c.l.b16 %v48
    %v113 = vunpack.c.l.b16 %v49
    %v114 = vunpack.c.l.b16 %v50
    %v115 = vunpack.c.l.b16 %v51
    %v116 = vunpack.c.l.b16 %v52
    %v117 = vunpack.c.l.b16 %v53
    %v118 = vunpack.c.l.b16 %v54
    %v119 = vunpack.c.l.b16 %v55
    %v120 = vunpack.c.l.b16 %v56
    %v121 = vunpack.c.l.b16 %v57
    %v122 = vunpack.c.l.b16 %v58
    %v123 = vunpack.c.l.b16 %v59
    %v124 = vunpack.c.l.b16 %v60
    %v125 = vunpack.c.l.b16 %v61
    %v126 = vunpack.c.l.b16 %v62
    %v127 = vunpack.c.l.b16 %v63
    %v128 = vunpack.c.l.b16 %v64
    %v129 = vunpack.c.l.b16 %v65
    %v130 = vunpack.c.l.b16 %v66
    %v131 = vunpack.c.l.b16 %v67
    %v132 = vunpack.c.l.b16 %v68
    %v133 = vunpack.c.l.b16 %v69
    %v134 = vunpack.c.l.b16 %v70
    %v135 = vunpack.c.l.b16 %v71
    %v136 = vunpack.c.l.b16 %v72
    %v137 = vunpack.c.l.b16 %v73
    %v138 = vunpack.c.l.b16 %v74
    %v139 = vpack.c.b16 %v108, %v107
    %v140 = vpack.c.b16 %v110, %v109
    %v141 = vpack.c.b16 %v112, %v111
    %v142 = vpack.c.b16 %v114, %v113
    %v143 = vpack.c.b16 %v116, %v115
    %v144 = vpack.c.b16 %v118, %v117
    %v145 = vpack.c.b16 %v120, %v119
    %v146 = vpack.c.b16 %v122, %v121
    %v147 = vpack.c.b16 %v124, %v123
    %v148 = vpack.c.b16 %v126, %v125
    %v149 = vpack.c.b16 %v128, %v127
    %v150 = vpack.c.b16 %v130, %v129
    %v151 = vpack.c.b16 %v132, %v131
    %v152 = vpack.c.b16 %v134, %v133
    %v153 = vpack.c.b16 %v136, %v135
    %v154 = vpack.c.b16 %v138, %v137
    %171 = vmatprep.subr.bf16.mxu0 0
    %172 = vmatpush1.bf16.msra.mxu0 %v139
    %173 = vmatprep.subr.bf16.mxu0 0
    %174 = vmatpush1.bf16.msra.mxu0 %v140
    %175 = vmatprep.subr.bf16.mxu0 0
    %176 = vmatpush1.bf16.msra.mxu0 %v141
    %177 = vmatprep.subr.bf16.mxu0 0
    %178 = vmatpush1.bf16.msra.mxu0 %v142
    %179 = vmatprep.subr.bf16.mxu0 0
    %180 = vmatpush1.bf16.msra.mxu0 %v143
    %181 = vmatprep.subr.bf16.mxu0 0
    %182 = vmatpush1.bf16.msra.mxu0 %v144
    %183 = vmatprep.subr.bf16.mxu0 0
    %184 = vmatpush1.bf16.msra.mxu0 %v145
    %185 = vmatprep.subr.bf16.mxu0 0
    %186 = vmatpush1.bf16.msra.mxu0 %v146
    %187 = vmatprep.subr.bf16.mxu0 0
    %188 = vmatpush1.bf16.msra.mxu0 %v147
    %189 = vmatprep.subr.bf16.mxu0 0
    %190 = vmatpush1.bf16.msra.mxu0 %v148
    %191 = vmatprep.subr.bf16.mxu0 0
    %192 = vmatpush1.bf16.msra.mxu0 %v149
    %193 = vmatprep.subr.bf16.mxu0 0
    %194 = vmatpush1.bf16.msra.mxu0 %v150
    %195 = vmatprep.subr.bf16.mxu0 0
    %196 = vmatpush1.bf16.msra.mxu0 %v151
    %197 = vmatprep.subr.bf16.mxu0 0
    %198 = vmatpush1.bf16.msra.mxu0 %v152
    %199 = vmatprep.subr.bf16.mxu0 0
    %200 = vmatpush1.bf16.msra.mxu0 %v153
    %201 = vmatprep.subr.bf16.mxu0 0
    %202 = vmatpush1.bf16.msra.mxu0 %v154
    %203 = vmatprep.mubr.bf16.mxu0 %v42
    %204 = vmatmul.mubr.bf16.gmra.mrb[0].mxu0 %v41
    %v205 = vpop.f32.mrb[0].mxu0
    %v206 = vadd.f32 0.0, %v205
    %v207 = vpop.f32.mrb[0].mxu0
    %v208 = vpop.f32.mrb[0].mxu0
    %v209 = vpop.f32.mrb[0].mxu0
    %210 = vdwg.mxu0
    %vm211 = vcmask 122880
    %212 = vst.msk [vmem:[#allocation4] sm:$0x1] %vm211, %v206
    // Predicated region
    $region10: #{tpu_custom_call.1} parent=1 // pred_check
      _
    $region11: #{tpu_custom_call.1} parent=1 // pred_check_branch
      %214 = sbr.rel (0) target = $region13
    $region12: #{tpu_custom_call.1} parent=1 // pred_region
      %s216 = ssub.s32 32, 32
      %217 = vsyncadd [#allocation3], %s216
      %s219 = sshll.u32 [#allocation2], 4
      %s220 = int_to_ptr.vmem [resolvable:$true] %s219
      %222 = dma.vmem_to_hbm [thread:$0]  %s220, 32, %s2, [#allocation3]
    $region13: #{tpu_custom_call.1} parent=1 // pred_fallthru
      _
    // Predicated region
    $region14: #{tpu_custom_call.1} parent=1 // pred_check
      _
    $region15: #{tpu_custom_call.1} parent=1 // pred_check_branch
      %224 = sbr.rel (0) target = $region17
    $region16: #{tpu_custom_call.1} parent=1 // pred_region
      %s226 = ssub.s32 16, 16
      %227 = vsyncadd [#allocation5], %s226
      %s229 = sshll.u32 [#allocation4], 4
      %s230 = int_to_ptr.vmem [resolvable:$true] %s229
      %232 = dma.vmem_to_hbm [thread:$0]  %s230, 16, %s3, [#allocation5]
    $region17: #{tpu_custom_call.1} parent=1 // pred_fallthru
      _
    // Predicated region
    $region18: #{tpu_custom_call.1} parent=1 // pred_check
      _
    $region19: #{tpu_custom_call.1} parent=1 // pred_check_branch
      %234 = sbr.rel (0) target = $region21
    $region20: #{tpu_custom_call.1} parent=1 // pred_region
      %235 = dma.done [#allocation3], 32
    $region21: #{tpu_custom_call.1} parent=1 // pred_fallthru
      _
    // Predicated region
    $region22: #{tpu_custom_call.1} parent=1 // pred_check
      _
    $region23: #{tpu_custom_call.1} parent=1 // pred_check_branch
      %237 = sbr.rel (0) target = $region25
    $region24: #{tpu_custom_call.1} parent=1 // pred_region
      %238 = dma.done [#allocation5], 16
    $region25: #{tpu_custom_call.1} parent=1 // pred_fallthru
      _
    %239 = vsyncpa [#allocation3], 1
    %240 = vsyncpa [#allocation5], 1

</llo_original>
